<compile_context>
chip_gen: v5e
topology: v5e:2x2
jax: 0.10.0
libtpu: 0.0.40
codegen_flags: <defaults>
</compile_context>

<pallas_src>
import jax
import jax.numpy as jnp
from jax.experimental import pallas as pl
from jax.experimental.pallas import tpu as pltpu

_EPS = 1e-5
_VMEM_LIMIT = 48 * 1024 * 1024          # safe on v7x (64 MiB physical) and v5e/v6e (128 MiB)
_BLOCK_BYTES_BUDGET = 2 * 1024 * 1024   # per-input-block budget (Pallas double-buffers it)
_MAX_BATCH_BLOCK = 8                    # in-kernel batch loop is unrolled; keep it short


def _lane_taps(x):
    """5-tap im2col: (C, L) -> (5*C, L), channels on sublanes / length on lanes.

    Row t*C + c, column l holds x[c, l + t - 2] (zero outside [0, L)) - exactly the K dim
    the fused conv matmul W(Cout, 5*C) x taps(5*C, L) needs.  Built on values; only the
    2+2 halo lanes are zeros.
    """
    C, L = x.shape
    halo = jnp.zeros((C, 2), x.dtype)
    xp = jnp.concatenate([halo, x, halo], axis=1)                         # (C, L + 4)
    return jnp.concatenate([xp[:, t:t + L] for t in range(5)], axis=0)   # (5*C, L)


def _conv1_kernel(x_ref, w_ref, y_ref, s_ref):
    """Conv1d(Cin->Cout, k=5, p=2) on the pooled input for one batch block.

    x_ref: (Nb, Cin, Lh)  bf16 pooled input (length on lanes)
    w_ref: (Cout, 5*Cin)  bf16 fused conv taps
    y_ref: (Nb, Cout, Lh) bf16 pre-BN conv output (lane-dense store)
    s_ref: (1, Cout, 2)   f32 per-channel (sum, sumsq); resident accumulator per core slab
    """
    @pl.when(pl.program_id(1) == 0)
    def _():
        s_ref[...] = jnp.zeros_like(s_ref)

    nb, cout = y_ref.shape[0], y_ref.shape[1]
    ssum = jnp.zeros((cout, 1), jnp.float32)
    ssq = jnp.zeros((cout, 1), jnp.float32)
    for b in range(nb):
        taps = _lane_taps(x_ref[b])                                          # (5*Cin, Lh)
        y = jnp.dot(w_ref[...], taps, preferred_element_type=jnp.float32)    # (Cout, Lh)
        # conv bias intentionally omitted: training-mode BN's mean subtraction cancels it.
        y_ref[b] = y.astype(y_ref.dtype)
        ssum = ssum + jnp.sum(y, axis=1, keepdims=True)
        ssq = ssq + jnp.sum(y * y, axis=1, keepdims=True)
    s_ref[...] += jnp.concatenate([ssum, ssq], axis=1)                       # (Cout, 2)


def _bn_relu_conv2_kernel(y1_ref, sc_ref, sh_ref, w_ref, y2_ref, s_ref):
    """BN1 (precomputed affine) + ReLU + Conv1d(Cout->Cout, k=5, p=2) for one batch block."""
    @pl.when(pl.program_id(1) == 0)
    def _():
        s_ref[...] = jnp.zeros_like(s_ref)

    nb, cout = y2_ref.shape[0], y2_ref.shape[1]
    scale = sc_ref[...]                                                      # (Cout, 1)
    shift = sh_ref[...]
    ssum = jnp.zeros((cout, 1), jnp.float32)
    ssq = jnp.zeros((cout, 1), jnp.float32)
    for b in range(nb):
        h = jnp.maximum(y1_ref[b].astype(jnp.float32) * scale + shift, 0.0)  # (Cout, Lh)
        taps = _lane_taps(h.astype(jnp.bfloat16))                            # (5*Cout, Lh)
        y = jnp.dot(w_ref[...], taps, preferred_element_type=jnp.float32)    # (Cout, Lh)
        # conv bias intentionally omitted (cancelled by BN2's mean subtraction).
        y2_ref[b] = y
        ssum = ssum + jnp.sum(y, axis=1, keepdims=True)
        ssq = ssq + jnp.sum(y * y, axis=1, keepdims=True)
    s_ref[...] += jnp.concatenate([ssum, ssq], axis=1)


def _bn_relu_kernel(y_ref, sc_ref, sh_ref, o_ref):
    """BN2 (precomputed affine) + ReLU for one batch block."""
    o_ref[...] = jnp.maximum(y_ref[...] * sc_ref[...] + sh_ref[...], 0.0)


def _bn_affine(stats_slabs, gamma, beta, inv_count):
    """Tiny XLA epilogue: per-channel BN scale/shift from accumulated (sum, sumsq)."""
    s = jnp.sum(stats_slabs, axis=0)                        # (Cout, 2), sum the per-core slabs
    mean = s[:, 0] * inv_count
    var = jnp.maximum(s[:, 1] * inv_count - mean * mean, 0.0)
    scale = gamma * jax.lax.rsqrt(var + _EPS)
    shift = beta - mean * scale
    cout = s.shape[0]
    return (scale.reshape(cout, 1).astype(jnp.float32),
            shift.reshape(cout, 1).astype(jnp.float32))


def _pick_batch_block(n, per_elem_bytes):
    """Largest divisor of n within the VMEM budget / unroll cap (>=2 grid steps when n>=2)."""
    cap = max(1, min(_BLOCK_BYTES_BUDGET // max(per_elem_bytes, 1),
                     max(1, n // 2), _MAX_BATCH_BLOCK))
    nb = 1
    for d in range(1, n + 1):
        if n % d == 0 and d <= cap:
            nb = d
    return nb


def down_forward(x_ncl, params):
    """x_ncl: (N, Cin, L) float32, PyTorch NCL convention. Returns (N, Cout, L//2) float32."""
    N, Cin, L = x_ncl.shape
    Lh = L // 2
    Cout = params["w1"].shape[0]
    inv_count = 1.0 / float(N * Lh)

    # MaxPool1d(2) + bf16 cast as ONE fused XLA elementwise pass (reads x once, writes the
    # half-length bf16 pooled tensor). Everything stays in the native NCL layout: no transposes.
    # TODO(synk): fold the stride-2 max into the stage-1 kernel via a strided lane load once
    # that lowering path is exercised; kept in the wrapper here for lowering robustness.
    pooled = jnp.maximum(x_ncl[:, :, 0:2 * Lh:2], x_ncl[:, :, 1:2 * Lh:2]).astype(jnp.bfloat16)

    # Fuse each conv's 5 taps into one (Cout, 5*C) bf16 MXU LHS; K index = t*C + c.
    w1c = jnp.transpose(params["w1"], (0, 2, 1)).reshape(Cout, 5 * Cin).astype(jnp.bfloat16)
    w2c = jnp.transpose(params["w2"], (0, 2, 1)).reshape(Cout, 5 * Cout).astype(jnp.bfloat16)
    g1 = params["gamma1"].astype(jnp.float32)
    b1 = params["beta1"].astype(jnp.float32)
    g2 = params["gamma2"].astype(jnp.float32)
    b2 = params["beta2"].astype(jnp.float32)

    # Batch blocking + 2-way "parallel" split so both v7x TensorCores get half the batch.
    per_elem = Lh * (2 * Cin + 2 * Cout + 8 * Cout)        # rough bytes per batch element
    nb = _pick_batch_block(N, per_elem)
    num_blocks = N // nb
    split = 2 if num_blocks % 2 == 0 else 1
    per_core = num_blocks // split

    def batch_block(c):
        return pl.BlockSpec((nb, c, Lh), lambda p, j: (p * per_core + j, 0, 0))

    def resident(shape):
        return pl.BlockSpec(shape, lambda p, j: (0,) * len(shape))

    stats_spec = pl.BlockSpec((1, Cout, 2), lambda p, j: (p, 0, 0))

    cparams = pltpu.CompilerParams(
        dimension_semantics=("parallel", "arbitrary"), vmem_limit_bytes=_VMEM_LIMIT)

    # Stage 1: conv1 (lane-dense (Cout, Lh) output) + BN1 stats accumulation.
    y1, s1 = pl.pallas_call(
        _conv1_kernel,
        grid=(split, per_core),
        in_specs=[batch_block(Cin), resident((Cout, 5 * Cin))],
        out_specs=[batch_block(Cout), stats_spec],
        out_shape=[jax.ShapeDtypeStruct((N, Cout, Lh), jnp.bfloat16),
                   jax.ShapeDtypeStruct((split, Cout, 2), jnp.float32)],
        compiler_params=cparams,
    )(pooled, w1c)

    sc1, sh1 = _bn_affine(s1, g1, b1, inv_count)

    # Stage 2: BN1 affine + ReLU + conv2 + BN2 stats accumulation.
    y2, s2 = pl.pallas_call(
        _bn_relu_conv2_kernel,
        grid=(split, per_core),
        in_specs=[batch_block(Cout), resident((Cout, 1)), resident((Cout, 1)),
                  resident((Cout, 5 * Cout))],
        out_specs=[batch_block(Cout), stats_spec],
        out_shape=[jax.ShapeDtypeStruct((N, Cout, Lh), jnp.float32),
                   jax.ShapeDtypeStruct((split, Cout, 2), jnp.float32)],
        compiler_params=cparams,
    )(y1, sc1, sh1, w2c)

    sc2, sh2 = _bn_affine(s2, g2, b2, inv_count)

    # Stage 3: BN2 affine + ReLU (pure elementwise -> fully parallel grid). Output is NCL.
    out = pl.pallas_call(
        _bn_relu_kernel,
        grid=(num_blocks,),
        in_specs=[pl.BlockSpec((nb, Cout, Lh), lambda i: (i, 0, 0)),
                  pl.BlockSpec((Cout, 1), lambda i: (0, 0)),
                  pl.BlockSpec((Cout, 1), lambda i: (0, 0))],
        out_specs=pl.BlockSpec((nb, Cout, Lh), lambda i: (i, 0, 0)),
        out_shape=jax.ShapeDtypeStruct((N, Cout, Lh), jnp.float32),
        compiler_params=pltpu.CompilerParams(
            dimension_semantics=("parallel",), vmem_limit_bytes=_VMEM_LIMIT),
    )(y2, sc2, sh2)

    return out


def down_reference(x_ncl, params, conv_dtype=jnp.float32):
    """Pure-JAX reference of the PyTorch forward (training-mode BN, biases included).

    conv_dtype: dtype conv operands are rounded to before the f32-accumulated contraction
    (bf16 mirrors the kernel's MXU precision; f32 is the exact PyTorch math).
    """
    Lh = x_ncl.shape[2] // 2
    pooled = jnp.maximum(x_ncl[:, :, 0:2 * Lh:2], x_ncl[:, :, 1:2 * Lh:2])

    def conv_bn_relu(x, w, b, g, beta):
        Lc = x.shape[2]
        xq = x.astype(conv_dtype).astype(jnp.float32)
        wq = w.astype(conv_dtype).astype(jnp.float32)
        xp = jnp.pad(xq, ((0, 0), (0, 0), (2, 2)))
        out = b[None, :, None]
        for t in range(5):
            out = out + jnp.einsum("ncl,oc->nol", xp[:, :, t:t + Lc], wq[:, :, t])
        mean = out.mean(axis=(0, 2), keepdims=True)
        var = ((out - mean) ** 2).mean(axis=(0, 2), keepdims=True)
        out = (out - mean) * jax.lax.rsqrt(var + _EPS) * g[None, :, None] + beta[None, :, None]
        return jnp.maximum(out, 0.0)

    h = conv_bn_relu(pooled, params["w1"], params["b1"], params["gamma1"], params["beta1"])
    return conv_bn_relu(h, params["w2"], params["b2"], params["gamma2"], params["beta2"])


if __name__ == "__main__":
    N, Cin, Cout, L = 2, 4, 8, 16

    key = jax.random.PRNGKey(0)
    kx, kw1, kb1, kw2, kb2 = jax.random.split(key, 5)

    # Deterministic synthetic parameters (PyTorch default BN affine init: gamma=1, beta=0).
    params = {
        "w1": jax.random.normal(kw1, (Cout, Cin, 5), jnp.float32) * 0.1,
        "b1": jax.random.normal(kb1, (Cout,), jnp.float32) * 0.1,
        "gamma1": jnp.ones((Cout,), jnp.float32),
        "beta1": jnp.zeros((Cout,), jnp.float32),
        "w2": jax.random.normal(kw2, (Cout, Cout, 5), jnp.float32) * 0.1,
        "b2": jax.random.normal(kb2, (Cout,), jnp.float32) * 0.1,
        "gamma2": jnp.ones((Cout,), jnp.float32),
        "beta2": jnp.zeros((Cout,), jnp.float32),
    }
    x = jax.random.normal(kx, (N, Cin, L), jnp.float32)

    out = jax.block_until_ready(jax.jit(down_forward)(x, params))
    assert out.shape == (N, Cout, L // 2), out.shape

    # Check against a reference in matched matmul precision (bf16 conv operands, f32 accumulate
    # = what the MXU computes; the bf16 y1 inter-stage store adds a small extra rounding).
    ref_bf16 = down_reference(x, params, conv_dtype=jnp.bfloat16)
    assert jnp.allclose(out, ref_bf16, rtol=2e-2, atol=2e-2), \
        float(jnp.max(jnp.abs(out - ref_bf16)))

    # Loose sanity check against the pure-f32 PyTorch-semantics reference.
    ref_f32 = down_reference(x, params, conv_dtype=jnp.float32)
    assert jnp.allclose(out, ref_f32, rtol=5e-2, atol=5e-2), \
        float(jnp.max(jnp.abs(out - ref_f32)))

    print("KERNEL_OK")
</pallas_src>

<mosaic_0001>
module attributes {stable_mosaic.version = 11 : i64} {
  func.func @_conv1_kernel(%arg0: i32, %arg1: i32, %arg2: memref<1x4x8xbf16, #tpu.memory_space<vmem>>, %arg3: memref<8x20xbf16, #tpu.memory_space<vmem>>, %arg4: memref<1x8x8xbf16, #tpu.memory_space<vmem>>, %arg5: memref<1x8x2xf32, #tpu.memory_space<vmem>>) attributes {dimension_semantics = [#tpu.dimension_semantics<parallel>, #tpu.dimension_semantics<arbitrary>], iteration_bounds = array<i64: 2, 1>, scalar_prefetch = 0 : i64, scratch_operands = 0 : i64, tpu.core_type = #tpu.core_type<tc>, window_params = [{transform_indices = @transform_0, window_bounds = array<i64: 1, 4, 8>}, {pipeline_mode = #tpu.pipeline_mode<synchronous>, transform_indices = @transform_1, window_bounds = array<i64: 8, 20>}, {transform_indices = @transform_2, window_bounds = array<i64: 1, 8, 8>}, {transform_indices = @transform_3, window_bounds = array<i64: 1, 8, 2>}]} {
    %c0_i32 = arith.constant 0 : i32
    %0 = arith.cmpi eq, %arg1, %c0_i32 : i32
    %1 = arith.extui %0 : i1 to i32
    %c0_i32_0 = arith.constant 0 : i32
    %2 = arith.cmpi ne, %1, %c0_i32_0 : i32
    scf.if %2 {
      %cst_19 = arith.constant 0.000000e+00 : f32
      %33 = vector.broadcast %cst_19 : f32 to vector<1x8x2xf32>
      %c0_20 = arith.constant 0 : index
      %c0_21 = arith.constant 0 : index
      %c0_22 = arith.constant 0 : index
      %34 = vector.load %arg5[%c0_20, %c0_21, %c0_22] : memref<1x8x2xf32, #tpu.memory_space<vmem>>, vector<1x8x2xf32>
      tpu.vector_store %arg5[%c0_20, %c0_21, %c0_22], %33 {strides = array<i32>} : memref<1x8x2xf32, #tpu.memory_space<vmem>>, vector<1x8x2xf32>,
    } else {
    }
    %cst = arith.constant 0.000000e+00 : f32
    %3 = vector.broadcast %cst : f32 to vector<8x1xf32>
    %cst_1 = arith.constant 0.000000e+00 : f32
    %4 = vector.broadcast %cst_1 : f32 to vector<8x1xf32>
    %c0 = arith.constant 0 : index
    %c0_2 = arith.constant 0 : index
    %c0_3 = arith.constant 0 : index
    %5 = vector.load %arg2[%c0, %c0_2, %c0_3] : memref<1x4x8xbf16, #tpu.memory_space<vmem>>, vector<1x4x8xbf16>
    %6 = vector.shape_cast %5 : vector<1x4x8xbf16> to vector<4x8xbf16>
    %cst_4 = arith.constant 0.000000e+00 : bf16
    %7 = vector.broadcast %cst_4 : bf16 to vector<4x2xbf16>
    %8 = tpu.concatenate %7, %6, %7 in 1 : vector<4x2xbf16>, vector<4x8xbf16>, vector<4x2xbf16> -> vector<4x12xbf16>
    %9 = vector.extract_strided_slice %8 {offsets = [0, 0], sizes = [4, 8], strides = [1, 1]} : vector<4x12xbf16> to vector<4x8xbf16>
    %10 = vector.extract_strided_slice %8 {offsets = [0, 1], sizes = [4, 8], strides = [1, 1]} : vector<4x12xbf16> to vector<4x8xbf16>
    %11 = vector.extract_strided_slice %8 {offsets = [0, 2], sizes = [4, 8], strides = [1, 1]} : vector<4x12xbf16> to vector<4x8xbf16>
    %12 = vector.extract_strided_slice %8 {offsets = [0, 3], sizes = [4, 8], strides = [1, 1]} : vector<4x12xbf16> to vector<4x8xbf16>
    %13 = vector.extract_strided_slice %8 {offsets = [0, 4], sizes = [4, 8], strides = [1, 1]} : vector<4x12xbf16> to vector<4x8xbf16>
    %14 = tpu.concatenate %9, %10, %11, %12, %13 in 0 : vector<4x8xbf16>, vector<4x8xbf16>, vector<4x8xbf16>, vector<4x8xbf16>, vector<4x8xbf16> -> vector<20x8xbf16>
    %c0_5 = arith.constant 0 : index
    %c0_6 = arith.constant 0 : index
    %15 = vector.load %arg3[%c0_5, %c0_6] : memref<8x20xbf16, #tpu.memory_space<vmem>>, vector<8x20xbf16>
    %cst_7 = arith.constant dense<0.000000e+00> : vector<8x8xf32>
    %16 = tpu.matmul %15, %14, %cst_7 {dimension_numbers = #tpu.dot_dimension_numbers<[1], [0], [0], [1], [0, 0, 1, 1], [], []>} : vector<8x20xbf16>, vector<20x8xbf16>, vector<8x8xf32> -> vector<8x8xf32>
    %17 = arith.truncf %16 : vector<8x8xf32> to vector<8x8xbf16>
    %c0_8 = arith.constant 0 : index
    %c0_9 = arith.constant 0 : index
    %c0_10 = arith.constant 0 : index
    %18 = vector.load %arg4[%c0_8, %c0_9, %c0_10] : memref<1x8x8xbf16, #tpu.memory_space<vmem>>, vector<1x8x8xbf16>
    %19 = vector.shape_cast %18 : vector<1x8x8xbf16> to vector<8x8xbf16>
    %20 = vector.shape_cast %17 : vector<8x8xbf16> to vector<1x8x8xbf16>
    tpu.vector_store %arg4[%c0_8, %c0_9, %c0_10], %20 {strides = array<i32>} : memref<1x8x8xbf16, #tpu.memory_space<vmem>>, vector<1x8x8xbf16>,
    %cst_11 = arith.constant dense<0.000000e+00> : vector<8xf32>
    %21 = vector.multi_reduction <add>, %16, %cst_11 [1] : vector<8x8xf32> to vector<8xf32>
    %22 = vector.shape_cast %21 : vector<8xf32> to vector<8x1xf32>
    %23 = arith.addf %3, %22 : vector<8x1xf32>
    %24 = arith.mulf %16, %16 : vector<8x8xf32>
    %cst_12 = arith.constant dense<0.000000e+00> : vector<8xf32>
    %25 = vector.multi_reduction <add>, %24, %cst_12 [1] : vector<8x8xf32> to vector<8xf32>
    %26 = vector.shape_cast %25 : vector<8xf32> to vector<8x1xf32>
    %27 = arith.addf %4, %26 : vector<8x1xf32>
    %c0_13 = arith.constant 0 : index
    %c0_14 = arith.constant 0 : index
    %c0_15 = arith.constant 0 : index
    %28 = vector.load %arg5[%c0_13, %c0_14, %c0_15] : memref<1x8x2xf32, #tpu.memory_space<vmem>>, vector<1x8x2xf32>
    %29 = tpu.concatenate %23, %27 in 1 : vector<8x1xf32>, vector<8x1xf32> -> vector<8x2xf32>
    %30 = vector.shape_cast %29 : vector<8x2xf32> to vector<1x8x2xf32>
    %31 = arith.addf %28, %30 : vector<1x8x2xf32>
    %c0_16 = arith.constant 0 : index
    %c0_17 = arith.constant 0 : index
    %c0_18 = arith.constant 0 : index
    %32 = vector.load %arg5[%c0_16, %c0_17, %c0_18] : memref<1x8x2xf32, #tpu.memory_space<vmem>>, vector<1x8x2xf32>
    tpu.vector_store %arg5[%c0_16, %c0_17, %c0_18], %31 {strides = array<i32>} : memref<1x8x2xf32, #tpu.memory_space<vmem>>, vector<1x8x2xf32>,
    return
  }
  func.func @transform_0(%arg0: i32, %arg1: i32) -> (i32, i32, i32) {
    %c1_i32 = arith.constant 1 : i32
    %0 = arith.muli %arg0, %c1_i32 : i32
    %1 = arith.addi %0, %arg1 : i32
    %c0_i32 = arith.constant 0 : i32
    %c0_i32_0 = arith.constant 0 : i32
    %c0_i32_1 = arith.constant 0 : i32
    return %1, %c0_i32, %c0_i32_0 : i32, i32, i32
  }
  func.func @transform_1(%arg0: i32, %arg1: i32) -> (i32, i32) {
    %c0_i32 = arith.constant 0 : i32
    %c0_i32_0 = arith.constant 0 : i32
    %c0_i32_1 = arith.constant 0 : i32
    return %c0_i32, %c0_i32_0 : i32, i32
  }
  func.func @transform_2(%arg0: i32, %arg1: i32) -> (i32, i32, i32) {
    %c1_i32 = arith.constant 1 : i32
    %0 = arith.muli %arg0, %c1_i32 : i32
    %1 = arith.addi %0, %arg1 : i32
    %c0_i32 = arith.constant 0 : i32
    %c0_i32_0 = arith.constant 0 : i32
    %c0_i32_1 = arith.constant 0 : i32
    return %1, %c0_i32, %c0_i32_0 : i32, i32, i32
  }
  func.func @transform_3(%arg0: i32, %arg1: i32) -> (i32, i32, i32) {
    %c0_i32 = arith.constant 0 : i32
    %c0_i32_0 = arith.constant 0 : i32
    %c0_i32_1 = arith.constant 0 : i32
    return %arg0, %c0_i32, %c0_i32_0 : i32, i32, i32
  }
}

module attributes {stable_mosaic.version = 11 : i64} {
  func.func @_bn_relu_conv2_kernel(%arg0: i32, %arg1: i32, %arg2: memref<1x8x8xbf16, #tpu.memory_space<vmem>>, %arg3: memref<8x1xf32, #tpu.memory_space<vmem>>, %arg4: memref<8x1xf32, #tpu.memory_space<vmem>>, %arg5: memref<8x40xbf16, #tpu.memory_space<vmem>>, %arg6: memref<1x8x8xf32, #tpu.memory_space<vmem>>, %arg7: memref<1x8x2xf32, #tpu.memory_space<vmem>>) attributes {dimension_semantics = [#tpu.dimension_semantics<parallel>, #tpu.dimension_semantics<arbitrary>], iteration_bounds = array<i64: 2, 1>, scalar_prefetch = 0 : i64, scratch_operands = 0 : i64, tpu.core_type = #tpu.core_type<tc>, window_params = [{transform_indices = @transform_0, window_bounds = array<i64: 1, 8, 8>}, {pipeline_mode = #tpu.pipeline_mode<synchronous>, transform_indices = @transform_1, window_bounds = array<i64: 8, 1>}, {pipeline_mode = #tpu.pipeline_mode<synchronous>, transform_indices = @transform_2, window_bounds = array<i64: 8, 1>}, {pipeline_mode = #tpu.pipeline_mode<synchronous>, transform_indices = @transform_3, window_bounds = array<i64: 8, 40>}, {transform_indices = @transform_4, window_bounds = array<i64: 1, 8, 8>}, {transform_indices = @transform_5, window_bounds = array<i64: 1, 8, 2>}]} {
    %c0_i32 = arith.constant 0 : i32
    %0 = arith.cmpi eq, %arg1, %c0_i32 : i32
    %1 = arith.extui %0 : i1 to i32
    %c0_i32_0 = arith.constant 0 : i32
    %2 = arith.cmpi ne, %1, %c0_i32_0 : i32
    scf.if %2 {
      %cst_24 = arith.constant 0.000000e+00 : f32
      %42 = vector.broadcast %cst_24 : f32 to vector<1x8x2xf32>
      %c0_25 = arith.constant 0 : index
      %c0_26 = arith.constant 0 : index
      %c0_27 = arith.constant 0 : index
      %43 = vector.load %arg7[%c0_25, %c0_26, %c0_27] : memref<1x8x2xf32, #tpu.memory_space<vmem>>, vector<1x8x2xf32>
      tpu.vector_store %arg7[%c0_25, %c0_26, %c0_27], %42 {strides = array<i32>} : memref<1x8x2xf32, #tpu.memory_space<vmem>>, vector<1x8x2xf32>,
    } else {
    }
    %c0 = arith.constant 0 : index
    %c0_1 = arith.constant 0 : index
    %3 = vector.load %arg3[%c0, %c0_1] : memref<8x1xf32, #tpu.memory_space<vmem>>, vector<8x1xf32>
    %c0_2 = arith.constant 0 : index
    %c0_3 = arith.constant 0 : index
    %4 = vector.load %arg4[%c0_2, %c0_3] : memref<8x1xf32, #tpu.memory_space<vmem>>, vector<8x1xf32>
    %cst = arith.constant 0.000000e+00 : f32
    %5 = vector.broadcast %cst : f32 to vector<8x1xf32>
    %cst_4 = arith.constant 0.000000e+00 : f32
    %6 = vector.broadcast %cst_4 : f32 to vector<8x1xf32>
    %c0_5 = arith.constant 0 : index
    %c0_6 = arith.constant 0 : index
    %c0_7 = arith.constant 0 : index
    %7 = vector.load %arg2[%c0_5, %c0_6, %c0_7] : memref<1x8x8xbf16, #tpu.memory_space<vmem>>, vector<1x8x8xbf16>
    %8 = vector.shape_cast %7 : vector<1x8x8xbf16> to vector<8x8xbf16>
    %9 = arith.extf %8 : vector<8x8xbf16> to vector<8x8xf32>
    %10 = vector.broadcast %3 : vector<8x1xf32> to vector<8x8xf32>
    %11 = arith.mulf %9, %10 : vector<8x8xf32>
    %12 = vector.broadcast %4 : vector<8x1xf32> to vector<8x8xf32>
    %13 = arith.addf %11, %12 : vector<8x8xf32>
    %cst_8 = arith.constant 0.000000e+00 : f32
    %14 = vector.broadcast %cst_8 : f32 to vector<8x8xf32>
    %15 = arith.maximumf %13, %14 : vector<8x8xf32>
    %16 = arith.truncf %15 : vector<8x8xf32> to vector<8x8xbf16>
    %cst_9 = arith.constant 0.000000e+00 : bf16
    %17 = vector.broadcast %cst_9 : bf16 to vector<8x2xbf16>
    %18 = tpu.concatenate %17, %16, %17 in 1 : vector<8x2xbf16>, vector<8x8xbf16>, vector<8x2xbf16> -> vector<8x12xbf16>
    %19 = vector.extract_strided_slice %18 {offsets = [0, 0], sizes = [8, 8], strides = [1, 1]} : vector<8x12xbf16> to vector<8x8xbf16>
    %20 = vector.extract_strided_slice %18 {offsets = [0, 1], sizes = [8, 8], strides = [1, 1]} : vector<8x12xbf16> to vector<8x8xbf16>
    %21 = vector.extract_strided_slice %18 {offsets = [0, 2], sizes = [8, 8], strides = [1, 1]} : vector<8x12xbf16> to vector<8x8xbf16>
    %22 = vector.extract_strided_slice %18 {offsets = [0, 3], sizes = [8, 8], strides = [1, 1]} : vector<8x12xbf16> to vector<8x8xbf16>
    %23 = vector.extract_strided_slice %18 {offsets = [0, 4], sizes = [8, 8], strides = [1, 1]} : vector<8x12xbf16> to vector<8x8xbf16>
    %24 = tpu.concatenate %19, %20, %21, %22, %23 in 0 : vector<8x8xbf16>, vector<8x8xbf16>, vector<8x8xbf16>, vector<8x8xbf16>, vector<8x8xbf16> -> vector<40x8xbf16>
    %c0_10 = arith.constant 0 : index
    %c0_11 = arith.constant 0 : index
    %25 = vector.load %arg5[%c0_10, %c0_11] : memref<8x40xbf16, #tpu.memory_space<vmem>>, vector<8x40xbf16>
    %cst_12 = arith.constant dense<0.000000e+00> : vector<8x8xf32>
    %26 = tpu.matmul %25, %24, %cst_12 {dimension_numbers = #tpu.dot_dimension_numbers<[1], [0], [0], [1], [0, 0, 1, 1], [], []>} : vector<8x40xbf16>, vector<40x8xbf16>, vector<8x8xf32> -> vector<8x8xf32>
    %c0_13 = arith.constant 0 : index
    %c0_14 = arith.constant 0 : index
    %c0_15 = arith.constant 0 : index
    %27 = vector.load %arg6[%c0_13, %c0_14, %c0_15] : memref<1x8x8xf32, #tpu.memory_space<vmem>>, vector<1x8x8xf32>
    %28 = vector.shape_cast %27 : vector<1x8x8xf32> to vector<8x8xf32>
    %29 = vector.shape_cast %26 : vector<8x8xf32> to vector<1x8x8xf32>
    tpu.vector_store %arg6[%c0_13, %c0_14, %c0_15], %29 {strides = array<i32>} : memref<1x8x8xf32, #tpu.memory_space<vmem>>, vector<1x8x8xf32>,
    %cst_16 = arith.constant dense<0.000000e+00> : vector<8xf32>
    %30 = vector.multi_reduction <add>, %26, %cst_16 [1] : vector<8x8xf32> to vector<8xf32>
    %31 = vector.shape_cast %30 : vector<8xf32> to vector<8x1xf32>
    %32 = arith.addf %5, %31 : vector<8x1xf32>
    %33 = arith.mulf %26, %26 : vector<8x8xf32>
    %cst_17 = arith.constant dense<0.000000e+00> : vector<8xf32>
    %34 = vector.multi_reduction <add>, %33, %cst_17 [1] : vector<8x8xf32> to vector<8xf32>
    %35 = vector.shape_cast %34 : vector<8xf32> to vector<8x1xf32>
    %36 = arith.addf %6, %35 : vector<8x1xf32>
    %c0_18 = arith.constant 0 : index
    %c0_19 = arith.constant 0 : index
    %c0_20 = arith.constant 0 : index
    %37 = vector.load %arg7[%c0_18, %c0_19, %c0_20] : memref<1x8x2xf32, #tpu.memory_space<vmem>>, vector<1x8x2xf32>
    %38 = tpu.concatenate %32, %36 in 1 : vector<8x1xf32>, vector<8x1xf32> -> vector<8x2xf32>
    %39 = vector.shape_cast %38 : vector<8x2xf32> to vector<1x8x2xf32>
    %40 = arith.addf %37, %39 : vector<1x8x2xf32>
    %c0_21 = arith.constant 0 : index
    %c0_22 = arith.constant 0 : index
    %c0_23 = arith.constant 0 : index
    %41 = vector.load %arg7[%c0_21, %c0_22, %c0_23] : memref<1x8x2xf32, #tpu.memory_space<vmem>>, vector<1x8x2xf32>
    tpu.vector_store %arg7[%c0_21, %c0_22, %c0_23], %40 {strides = array<i32>} : memref<1x8x2xf32, #tpu.memory_space<vmem>>, vector<1x8x2xf32>,
    return
  }
  func.func @transform_0(%arg0: i32, %arg1: i32) -> (i32, i32, i32) {
    %c1_i32 = arith.constant 1 : i32
    %0 = arith.muli %arg0, %c1_i32 : i32
    %1 = arith.addi %0, %arg1 : i32
    %c0_i32 = arith.constant 0 : i32
    %c0_i32_0 = arith.constant 0 : i32
    %c0_i32_1 = arith.constant 0 : i32
    return %1, %c0_i32, %c0_i32_0 : i32, i32, i32
  }
  func.func @transform_1(%arg0: i32, %arg1: i32) -> (i32, i32) {
    %c0_i32 = arith.constant 0 : i32
    %c0_i32_0 = arith.constant 0 : i32
    %c0_i32_1 = arith.constant 0 : i32
    return %c0_i32, %c0_i32_0 : i32, i32
  }
  func.func @transform_2(%arg0: i32, %arg1: i32) -> (i32, i32) {
    %c0_i32 = arith.constant 0 : i32
    %c0_i32_0 = arith.constant 0 : i32
    %c0_i32_1 = arith.constant 0 : i32
    return %c0_i32, %c0_i32_0 : i32, i32
  }
  func.func @transform_3(%arg0: i32, %arg1: i32) -> (i32, i32) {
    %c0_i32 = arith.constant 0 : i32
    %c0_i32_0 = arith.constant 0 : i32
    %c0_i32_1 = arith.constant 0 : i32
    return %c0_i32, %c0_i32_0 : i32, i32
  }
  func.func @transform_4(%arg0: i32, %arg1: i32) -> (i32, i32, i32) {
    %c1_i32 = arith.constant 1 : i32
    %0 = arith.muli %arg0, %c1_i32 : i32
    %1 = arith.addi %0, %arg1 : i32
    %c0_i32 = arith.constant 0 : i32
    %c0_i32_0 = arith.constant 0 : i32
    %c0_i32_1 = arith.constant 0 : i32
    return %1, %c0_i32, %c0_i32_0 : i32, i32, i32
  }
  func.func @transform_5(%arg0: i32, %arg1: i32) -> (i32, i32, i32) {
    %c0_i32 = arith.constant 0 : i32
    %c0_i32_0 = arith.constant 0 : i32
    %c0_i32_1 = arith.constant 0 : i32
    return %arg0, %c0_i32, %c0_i32_0 : i32, i32, i32
  }
}

module attributes {stable_mosaic.version = 11 : i64} {
  func.func @_bn_relu_kernel(%arg0: i32, %arg1: memref<1x8x8xf32, #tpu.memory_space<vmem>>, %arg2: memref<8x1xf32, #tpu.memory_space<vmem>>, %arg3: memref<8x1xf32, #tpu.memory_space<vmem>>, %arg4: memref<1x8x8xf32, #tpu.memory_space<vmem>>) attributes {dimension_semantics = [#tpu.dimension_semantics<parallel>], iteration_bounds = array<i64: 2>, scalar_prefetch = 0 : i64, scratch_operands = 0 : i64, tpu.core_type = #tpu.core_type<tc>, window_params = [{transform_indices = @transform_0, window_bounds = array<i64: 1, 8, 8>}, {pipeline_mode = #tpu.pipeline_mode<synchronous>, transform_indices = @transform_1, window_bounds = array<i64: 8, 1>}, {pipeline_mode = #tpu.pipeline_mode<synchronous>, transform_indices = @transform_2, window_bounds = array<i64: 8, 1>}, {transform_indices = @transform_3, window_bounds = array<i64: 1, 8, 8>}]} {
    %c0 = arith.constant 0 : index
    %c0_0 = arith.constant 0 : index
    %c0_1 = arith.constant 0 : index
    %0 = vector.load %arg1[%c0, %c0_0, %c0_1] : memref<1x8x8xf32, #tpu.memory_space<vmem>>, vector<1x8x8xf32>
    %c0_2 = arith.constant 0 : index
    %c0_3 = arith.constant 0 : index
    %1 = vector.load %arg2[%c0_2, %c0_3] : memref<8x1xf32, #tpu.memory_space<vmem>>, vector<8x1xf32>
    %2 = vector.shape_cast %1 : vector<8x1xf32> to vector<1x8x1xf32>
    %3 = vector.broadcast %2 : vector<1x8x1xf32> to vector<1x8x8xf32>
    %4 = arith.mulf %0, %3 : vector<1x8x8xf32>
    %c0_4 = arith.constant 0 : index
    %c0_5 = arith.constant 0 : index
    %5 = vector.load %arg3[%c0_4, %c0_5] : memref<8x1xf32, #tpu.memory_space<vmem>>, vector<8x1xf32>
    %6 = vector.shape_cast %5 : vector<8x1xf32> to vector<1x8x1xf32>
    %7 = vector.broadcast %6 : vector<1x8x1xf32> to vector<1x8x8xf32>
    %8 = arith.addf %4, %7 : vector<1x8x8xf32>
    %cst = arith.constant 0.000000e+00 : f32
    %9 = vector.broadcast %cst : f32 to vector<1x8x8xf32>
    %10 = arith.maximumf %8, %9 : vector<1x8x8xf32>
    %c0_6 = arith.constant 0 : index
    %c0_7 = arith.constant 0 : index
    %c0_8 = arith.constant 0 : index
    %11 = vector.load %arg4[%c0_6, %c0_7, %c0_8] : memref<1x8x8xf32, #tpu.memory_space<vmem>>, vector<1x8x8xf32>
    tpu.vector_store %arg4[%c0_6, %c0_7, %c0_8], %10 {strides = array<i32>} : memref<1x8x8xf32, #tpu.memory_space<vmem>>, vector<1x8x8xf32>,
    return
  }
  func.func @transform_0(%arg0: i32) -> (i32, i32, i32) {
    %c0_i32 = arith.constant 0 : i32
    %c0_i32_0 = arith.constant 0 : i32
    %c0_i32_1 = arith.constant 0 : i32
    return %arg0, %c0_i32, %c0_i32_0 : i32, i32, i32
  }
  func.func @transform_1(%arg0: i32) -> (i32, i32) {
    %c0_i32 = arith.constant 0 : i32
    %c0_i32_0 = arith.constant 0 : i32
    %c0_i32_1 = arith.constant 0 : i32
    return %c0_i32, %c0_i32_0 : i32, i32
  }
  func.func @transform_2(%arg0: i32) -> (i32, i32) {
    %c0_i32 = arith.constant 0 : i32
    %c0_i32_0 = arith.constant 0 : i32
    %c0_i32_1 = arith.constant 0 : i32
    return %c0_i32, %c0_i32_0 : i32, i32
  }
  func.func @transform_3(%arg0: i32) -> (i32, i32, i32) {
    %c0_i32 = arith.constant 0 : i32
    %c0_i32_0 = arith.constant 0 : i32
    %c0_i32_1 = arith.constant 0 : i32
    return %arg0, %c0_i32, %c0_i32_0 : i32, i32, i32
  }
}

</mosaic_0001>

<llo_original>
// kernel: down_forward.3
$region0: #{down_forward.3}
  #allocation0 [shape = 'u32[]', space=smem, size = 0x4, offset = 0x4, fixed_abs, tag = 'smem constant byte address 0x4 - core index']
  #allocation1 [shape = 'u32[72,128]{1,0:T(1,128)}', space=vmem, size = 0x9000, scoped, tag = 'internal scratch']
  %s0 = inlined_call_operand.vmem [shape: bf16[2,4,8], index: 0, kind: input, shape index: {}]
  %s1 = inlined_call_operand.vmem [shape: bf16[8,20], index: 1, kind: input, shape index: {}]
  %s2 = inlined_call_operand.vmem [shape: bf16[2,8,8], index: 2, kind: output, shape index: {0}]
  %s3 = inlined_call_operand.vmem [shape: f32[2,8,2], index: 3, kind: output, shape index: {1}]
  %4 = xla_tuple %s2, %s3
  %s5 = sld [smem:[#allocation0]]
  $region53: #{down_forward.3} parent=0
    _
  %s7 = ssub.s32 1, %s5
  %s8 = scalar_select 0, %s7, %s5
  loop: start=0, step=1, limit=4
  $region2: #{down_forward.3} parent=0 // loop_pre_header
    _
  $region3: #{down_forward.3} parent=0 // loop_header
    %s10 = sphi 0, %s14
    %p11 = scmp.ge.s32.totalorder %s10, 4
    %s17 = sphi 0, %s29
    %s18 = sphi 0, %s25
    %s19 = sphi 0, %s17
    %s20 = sphi 0, %s18
    %s21 = sphi 0, %s19
    %s22 = sphi 0, %s20
    %s34 = sphi 0, %s36
    %s37 = sphi 0, %s34
    %s38 = sphi 0, %s37
    %s54 = sphi 0, %s38
    %s58 = sphi 0, %s58
    %s60 = sphi 0, %s58
    %s61 = sphi 0, %s60
    %s75 = sphi 0, %s61
    %s83 = sphi 0, %s85
    %s86 = sphi 0, %s83
    %s87 = sphi 0, %s86
    %s103 = sphi 0, %s87
    %s109 = sphi 0, %s111
    %s112 = sphi 0, %s109
    %s113 = sphi 0, %s112
    %s129 = sphi 0, %s113
  $region4: #{down_forward.3} parent=0 // loop_header_branch
    %13 = sbr.rel (%p11) target = $region8
  $region5: #{down_forward.3} parent=0 // loop_body
    %s15 = ssub.s32 %s10, 1
    %s16 = ssub.s32 %s10, 2
    %s23 = sadd.s32 1, %s18
    %p24 = scmp.ge.s32.totalorder %s23, 1
    %s25 = scalar_select %p24, 0, %s23
    %s26 = sadd.s32 1, %s17
    %s27 = scalar_select %p24, %s26, %s17
    %p28 = scmp.ge.s32.totalorder %s27, 2
    %s29 = scalar_select %p28, 0, %s27
    %s30 = sadd.s32 %s17, %s18
    %s31 = sadd.s32 %s29, %s25
    %s32 = ssub.s32 %s30, %s31
    %p33 = scmp.eq.s32.totalorder %s32, 0
    %s35 = sadd.s32 %s34, 1
    %s36 = scalar_select %p33, %s34, %s35
    %p39 = pneg %p33
    %p40 = scmp.eq.s32.totalorder %s10, 1
    %p41 = por %p39, %p40
    %p42 = scmp.ne.s32.totalorder %s34, %s37
    %p43 = scmp.eq.s32.totalorder %s10, 0
    %p44 = por %p42, %p43
    %p45 = scmp.ne.s32.totalorder %s34, %s37
    %p46 = scmp.eq.s32.totalorder %s15, 1
    %p47 = por %p45, %p46
    %p48 = scmp.ne.s32.totalorder %s37, %s38
    %p49 = scmp.eq.s32.totalorder %s15, 0
    %p50 = por %p48, %p49
    %p51 = scmp.ne.s32.totalorder %s37, %s38
    %p52 = scmp.eq.s32.totalorder %s16, 1
    %p53 = por %p51, %p52
    %p55 = scmp.ne.s32.totalorder %s38, %s54
    %p56 = scmp.eq.s32.totalorder %s16, 0
    %p57 = por %p55, %p56
    %s59 = sadd.s32 %s58, 1
    %p62 = scmp.eq.s32.totalorder %s10, 1
    %p63 = scmp.ne.s32.totalorder %s58, %s60
    %p64 = scmp.eq.s32.totalorder %s10, 0
    %p65 = por %p63, %p64
    %p66 = scmp.ne.s32.totalorder %s58, %s60
    %p67 = scmp.eq.s32.totalorder %s15, 1
    %p68 = por %p66, %p67
    %p69 = scmp.ne.s32.totalorder %s60, %s61
    %p70 = scmp.eq.s32.totalorder %s15, 0
    %p71 = por %p69, %p70
    %p72 = scmp.ne.s32.totalorder %s60, %s61
    %p73 = scmp.eq.s32.totalorder %s16, 1
    %p74 = por %p72, %p73
    %p76 = scmp.ne.s32.totalorder %s61, %s75
    %p77 = scmp.eq.s32.totalorder %s16, 0
    %p78 = por %p76, %p77
    %s79 = sadd.s32 %s17, %s18
    %s80 = sadd.s32 %s29, %s25
    %s81 = ssub.s32 %s79, %s80
    %p82 = scmp.eq.s32.totalorder %s81, 0
    %s84 = sadd.s32 %s83, 1
    %s85 = scalar_select %p82, %s83, %s84
    %p88 = pneg %p82
    %p89 = scmp.eq.s32.totalorder %s10, 1
    %p90 = por %p88, %p89
    %p91 = scmp.ne.s32.totalorder %s83, %s86
    %p92 = scmp.eq.s32.totalorder %s10, 0
    %p93 = por %p91, %p92
    %p94 = scmp.ne.s32.totalorder %s83, %s86
    %p95 = scmp.eq.s32.totalorder %s15, 1
    %p96 = por %p94, %p95
    %p97 = scmp.ne.s32.totalorder %s86, %s87
    %p98 = scmp.eq.s32.totalorder %s15, 0
    %p99 = por %p97, %p98
    %p100 = scmp.ne.s32.totalorder %s86, %s87
    %p101 = scmp.eq.s32.totalorder %s16, 1
    %p102 = por %p100, %p101
    %p104 = scmp.ne.s32.totalorder %s87, %s103
    %p105 = scmp.eq.s32.totalorder %s16, 0
    %p106 = por %p104, %p105
    %s107 = ssub.s32 %s17, %s29
    %p108 = scmp.eq.s32.totalorder %s107, 0
    %s110 = sadd.s32 %s109, 1
    %s111 = scalar_select %p108, %s109, %s110
    %p114 = pneg %p108
    %p115 = scmp.eq.s32.totalorder %s10, 1
    %p116 = por %p114, %p115
    %p117 = scmp.ne.s32.totalorder %s109, %s112
    %p118 = scmp.eq.s32.totalorder %s10, 0
    %p119 = por %p117, %p118
    %p120 = scmp.ne.s32.totalorder %s109, %s112
    %p121 = scmp.eq.s32.totalorder %s15, 1
    %p122 = por %p120, %p121
    %p123 = scmp.ne.s32.totalorder %s112, %s113
    %p124 = scmp.eq.s32.totalorder %s15, 0
    %p125 = por %p123, %p124
    %p126 = scmp.ne.s32.totalorder %s112, %s113
    %p127 = scmp.eq.s32.totalorder %s16, 1
    %p128 = por %p126, %p127
    %p130 = scmp.ne.s32.totalorder %s113, %s129
    %p131 = scmp.eq.s32.totalorder %s16, 0
    %p132 = por %p130, %p131
    %p133 = scmp.le.s32.totalorder 1, %s10
    %p134 = scmp.lt.s32.totalorder %s10, 3
    %p135 = pnand %p133, %p134
    %p136 = pneg %p135
    // Predicated region
    $region9: #{down_forward.3} parent=5 // pred_check
      _
    $region10: #{down_forward.3} parent=5 // pred_check_branch
      %138 = sbr.rel (%p135) target = $region12
    $region11: #{down_forward.3} parent=5 // pred_region
      %s139 = ssub.s32 %s10, 1
      // Predicated region
      $region13: #{down_forward.3} parent=11 // pred_check
        %p140 = pneg %p71
      $region14: #{down_forward.3} parent=11 // pred_check_branch
        %142 = sbr.rel (%p140) target = $region16
      $region15: #{down_forward.3} parent=11 // pred_region
        _
      $region16: #{down_forward.3} parent=11 // pred_fallthru
        _
    $region12: #{down_forward.3} parent=5 // pred_fallthru
      _
    %p143 = scmp.lt.s32.totalorder %s10, 2
    // Predicated region
    $region17: #{down_forward.3} parent=5 // pred_check
      %p144 = pneg %p143
    $region18: #{down_forward.3} parent=5 // pred_check_branch
      %146 = sbr.rel (%p144) target = $region20
    $region19: #{down_forward.3} parent=5 // pred_region
      // Predicated region
      $region21: #{down_forward.3} parent=19 // pred_check
        %p147 = pneg %p44
      $region22: #{down_forward.3} parent=19 // pred_check_branch
        %149 = sbr.rel (%p147) target = $region24
      $region23: #{down_forward.3} parent=19 // pred_region
        %s150 = sadd.s32 %s17, %s18
        %p151 = scmp.lt.s32.totalorder %s150, 1
        %s152 = scalar_select %p151, %s150, 1
        %s153 = smul.addr %s152, 2
        %s154 = scalar_lea.vmem %s0, %s153
        %s155 = sadd.s32 %s17, %s18
      $region24: #{down_forward.3} parent=19 // pred_fallthru
        _
    $region20: #{down_forward.3} parent=5 // pred_fallthru
      _
    %p156 = scmp.le.s32.totalorder 1, %s10
    %p157 = scmp.lt.s32.totalorder %s10, 3
    %p158 = pnand %p156, %p157
    %p159 = pneg %p158
    // Predicated region
    $region25: #{down_forward.3} parent=5 // pred_check
      _
    $region26: #{down_forward.3} parent=5 // pred_check_branch
      %161 = sbr.rel (%p158) target = $region28
    $region27: #{down_forward.3} parent=5 // pred_region
      %s162 = ssub.s32 %s10, 1
      %s163 = sadd.s32 %s19, %s20
      %p164 = scmp.lt.s32.totalorder %s163, 1
      %s165 = scalar_select %p164, %s163, 1
      %s166 = smul.addr %s165, 2
      %s167 = scalar_lea.vmem %s0, %s166
      %p168 = pneg %p50
      %p169 = pneg %p47
      %p170 = pneg %p71
      %p171 = pneg %p68
      %p172 = pneg %p99
      %p173 = pneg %p96
      %s174 = sadd.s32 %s19, %s20
      %p175 = scmp.lt.s32.totalorder %s174, 1
      %s176 = scalar_select %p175, %s174, 1
      %s177 = smul.addr %s176, 4
      %s178 = scalar_lea.vmem %s2, %s177
      %p179 = pneg %p125
      %p180 = pneg %p122
      %p181 = scmp.lt.s32.totalorder %s19, 1
      %s182 = scalar_select %p181, %s19, 1
      %s183 = smul.addr %s182, 8
      %s184 = scalar_lea.vmem %s3, %s183
      %s185 = sadd.s32 %s19, %s20
      %p186 = scmp.lt.s32.totalorder %s185, 1
      %s187 = scalar_select %p186, %s185, 1
      %s188 = smul.addr %s187, 2
      %s189 = scalar_lea.vmem %s0, %s188
      %s190 = sadd.s32 %s19, %s20
      %s191 = sadd.s32 %s19, %s20
      %p192 = scmp.lt.s32.totalorder %s191, 1
      %s193 = scalar_select %p192, %s191, 1
      %s194 = smul.addr %s193, 4
      %s195 = scalar_lea.vmem %s2, %s194
      %s196 = sadd.s32 %s19, %s20
      %p197 = scmp.lt.s32.totalorder %s19, 1
      %s198 = scalar_select %p197, %s19, 1
      %s199 = smul.addr %s198, 8
      %s200 = scalar_lea.vmem %s3, %s199
      %p202 = scmp.eq.s32.totalorder %s20, 0
      // Predicated region
      $region29: #{down_forward.3} parent=27 // pred_check
        %p203 = pneg %p202
      $region30: #{down_forward.3} parent=27 // pred_check_branch
        %205 = sbr.rel (%p203) target = $region32
      $region31: #{down_forward.3} parent=27 // pred_region
        %vm206 = vcmask 15360
        %207 = vst.msk [vmem:[%s200] sm:$0xff] %vm206, 0.0
      $region32: #{down_forward.3} parent=27 // pred_fallthru
        _
      %v208 = vld [vmem:[%s189] sm:$0x3]
      %210 = vst [vmem:[#allocation1] ss:$4 sm:$0xff] %v208
      %v211 = vld.sshfl [vmem:[#allocation1] sm:$0xff pattern:$0x73625140]
      %213 = vrot.lane.b32.xlu0 %v211, 2
      %v214 = vpop.permute.xlu0 %213
      %vm215 = vcmask 15360
      %v218 = vsel %vm215, 0, %v214
      %vm219 = vcmask 80896
      %v220 = vsel %vm219, %v218, 0
      %v222 = vrot.slane %v220, 6
      %223 = vrot.lane.b32.xlu0 %v222, 127
      %v224 = vpop.permute.xlu0 %223
      %v225 = vrot.slane %v220, 4
      %226 = vrot.lane.b32.xlu0 %v225, 126
      %v227 = vpop.permute.xlu0 %226
      %v228 = vrot.slane %v220, 2
      %229 = vrot.lane.b32.xlu0 %v228, 125
      %v230 = vpop.permute.xlu0 %229
      %231 = vrot.lane.b32.xlu0 %v220, 124
      %v232 = vpop.permute.xlu0 %231
      %vm233 = vcmask 1041408
      %v235 = vsel %vm233, %v220, %v224
      %vm236 = vcmask 1043456
      %v238 = vsel %vm236, %v235, %v227
      %vm239 = vcmask 1045504
      %v241 = vsel %vm239, %v238, %v230
      %v243 = vld [vmem:[%s1] sm:$0xf]
      %vm244 = vcmask 162816
      %v246 = vsel %vm244, %v243, 0
      %v249 = vsel %vm233, %v232, 0
      %251 = vmatpush.bf16.msra.mxu0 0
      %252 = vmatpush.bf16.msra.mxu0 0
      %253 = vmatpush.bf16.msra.mxu0 0
      %254 = vmatpush.bf16.msra.mxu0 0
      %255 = vmatpush.bf16.msra.mxu0 0
      %256 = vmatpush.bf16.msra.mxu0 0
      %257 = vmatpush.bf16.msra.mxu0 %v249
      %258 = vmatpush.bf16.msra.mxu0 %v241
      %259 = vmatmul.bf16.gmra.mxu0 %v246
      %v260 = vpop.f32.mrf.mxu0
      %v261 = vadd.f32 0.0, %v260
      %v262 = vpop.f32.mrf.mxu0
      %263 = vdwg.mxu0
      %v264 = vpack.c.bf16 %v261, %v261
      %vm265 = vcmask 60416
      %266 = vst.msk [vmem:[%s195] sm:$0xf] %vm265, %v264
      %vm267 = vcmask 64512
      %v268 = vsel %vm267, %v261, 0.0
      %269 = vadd.xlane.f32.xlu0 %v268
      %v270 = vpop.xlane.xlu0 %269
      %v271 = vadd.f32 %v270, 0.0
      %v272 = vmul.f32 %v261, %v261
      %v273 = vsel %vm267, %v272, 0.0
      %274 = vadd.xlane.f32.xlu0 %v273
      %v275 = vpop.xlane.xlu0 %274
      %v276 = vadd.f32 %v275, 0.0
      %v277 = vld [vmem:[%s200] sm:$0xff]
      %vm278 = vcmask 7168
      %v279 = vsel %vm278, %v271, %v276
      %v280 = vadd.f32 %v277, %v279
      %281 = vst.msk [vmem:[%s200] sm:$0xff] %vm215, %v280
      %s282 = sadd.s32 %s19, %s20
      %p283 = scmp.lt.s32.totalorder %s282, 1
      %s284 = scalar_select %p283, %s282, 1
      %s285 = smul.addr %s284, 4
      %s286 = scalar_lea.vmem %s2, %s285
      %p287 = scmp.lt.s32.totalorder %s19, 1
      %s288 = scalar_select %p287, %s19, 1
      %s289 = smul.addr %s288, 8
      %s290 = scalar_lea.vmem %s3, %s289
      // Predicated region
      $region33: #{down_forward.3} parent=27 // pred_check
        %p291 = pneg %p96
      $region34: #{down_forward.3} parent=27 // pred_check_branch
        %293 = sbr.rel (%p291) target = $region36
      $region35: #{down_forward.3} parent=27 // pred_region
        %s294 = sadd.s32 %s19, %s20
      $region36: #{down_forward.3} parent=27 // pred_fallthru
        _
      // Predicated region
      $region37: #{down_forward.3} parent=27 // pred_check
        %p295 = pneg %p122
      $region38: #{down_forward.3} parent=27 // pred_check_branch
        %297 = sbr.rel (%p295) target = $region40
      $region39: #{down_forward.3} parent=27 // pred_region
        _
      $region40: #{down_forward.3} parent=27 // pred_fallthru
        _
    $region28: #{down_forward.3} parent=5 // pred_fallthru
      _
    %p298 = scmp.le.s32.totalorder 2, %s10
    // Predicated region
    $region41: #{down_forward.3} parent=5 // pred_check
      %p299 = pneg %p298
    $region42: #{down_forward.3} parent=5 // pred_check_branch
      %301 = sbr.rel (%p299) target = $region44
    $region43: #{down_forward.3} parent=5 // pred_region
      %s302 = ssub.s32 %s10, 2
      // Predicated region
      $region45: #{down_forward.3} parent=43 // pred_check
        %p303 = pneg %p102
      $region46: #{down_forward.3} parent=43 // pred_check_branch
        %305 = sbr.rel (%p303) target = $region48
      $region47: #{down_forward.3} parent=43 // pred_region
        %s306 = sadd.s32 %s21, %s22
        %p307 = scmp.lt.s32.totalorder %s306, 1
        %s308 = scalar_select %p307, %s306, 1
        %s309 = smul.addr %s308, 4
        %s310 = scalar_lea.vmem %s2, %s309
      $region48: #{down_forward.3} parent=43 // pred_fallthru
        _
      // Predicated region
      $region49: #{down_forward.3} parent=43 // pred_check
        %p311 = pneg %p128
      $region50: #{down_forward.3} parent=43 // pred_check_branch
        %313 = sbr.rel (%p311) target = $region52
      $region51: #{down_forward.3} parent=43 // pred_region
        %p314 = scmp.lt.s32.totalorder %s21, 1
        %s315 = scalar_select %p314, %s21, 1
        %s316 = smul.addr %s315, 8
        %s317 = scalar_lea.vmem %s3, %s316
      $region52: #{down_forward.3} parent=43 // pred_fallthru
        _
    $region44: #{down_forward.3} parent=5 // pred_fallthru
      _
  $region6: #{down_forward.3} parent=0 // loop_footer
    %s14 = sadd.s32 1, %s10
  $region7: #{down_forward.3} parent=0 // loop_footer_branch
    %9 = sbr.rel target = $region3
  $region8: #{down_forward.3} parent=0 // loop_exit
    _

// kernel: down_forward.5
$region0: #{down_forward.5}
  #allocation0 [shape = 'u32[]', space=smem, size = 0x4, offset = 0x4, fixed_abs, tag = 'smem constant byte address 0x4 - core index']
  #allocation1 [shape = 'u32[72,128]{1,0:T(1,128)}', space=vmem, size = 0x9000, scoped, tag = 'internal scratch']
  %s0 = inlined_call_operand.vmem [shape: f32[2,8,8], index: 0, kind: input, shape index: {}]
  %s1 = inlined_call_operand.vmem [shape: f32[8,1], index: 1, kind: input, shape index: {}]
  %s2 = inlined_call_operand.vmem [shape: f32[8,1], index: 2, kind: input, shape index: {}]
  %s3 = inlined_call_operand.hbm [shape: f32[2,8,8], index: 3, kind: output, shape index: {}]
  %s4 = sld [smem:[#allocation0]]
  $region45: #{down_forward.5} parent=0
    _
  %s6 = ssub.s32 1, %s4
  %s7 = scalar_select 0, %s6, %s4
  $region1: #{down_forward.5} parent=0
    #allocation2 [shape = 'u8[8192]{0}', space=vmem, size = 0x2000, scoped, tag = 'output window, operand 0']
    #allocation3 [shape = 's32[2]{0}', space=sflag, size = 0x8, scoped, tag = 'scoped memory for down_forward.5']
    %8 = vsyncpa [#allocation3], 0
    %s9 = scalar_lea.sflag [#allocation3], 1
    %10 = vsyncpa %s9, 0
    loop: start=0, step=1, limit=4
    $region2: #{down_forward.5} parent=1 // loop_pre_header
      _
    $region3: #{down_forward.5} parent=1 // loop_header
      %s12 = sphi 0, %s16
      %p13 = scmp.ge.s32.totalorder %s12, 4
      %s22 = sphi 0, %s24
      %s25 = sphi 0, %s22
      %s26 = sphi 0, %s25
      %s42 = sphi 0, %s26
      %s46 = sphi 0, %s46
      %s48 = sphi 0, %s46
      %s49 = sphi 0, %s48
      %s63 = sphi 0, %s49
      %s67 = sphi 0, %s67
      %s69 = sphi 0, %s67
      %s70 = sphi 0, %s69
      %s84 = sphi 0, %s70
      %s90 = sphi 0, %s92
      %s93 = sphi 0, %s90
      %s94 = sphi 0, %s93
      %s110 = sphi 0, %s94
    $region4: #{down_forward.5} parent=1 // loop_header_branch
      %15 = sbr.rel (%p13) target = $region8
    $region5: #{down_forward.5} parent=1 // loop_body
      %s17 = ssub.s32 %s12, 1
      %s18 = ssub.s32 %s12, 2
      %s19 = sadd.s32 %s12, 1
      %s20 = ssub.s32 %s12, %s19
      %p21 = scmp.eq.s32.totalorder %s20, 0
      %s23 = sadd.s32 %s22, 1
      %s24 = scalar_select %p21, %s22, %s23
      %p27 = pneg %p21
      %p28 = scmp.eq.s32.totalorder %s12, 1
      %p29 = por %p27, %p28
      %p30 = scmp.ne.s32.totalorder %s22, %s25
      %p31 = scmp.eq.s32.totalorder %s12, 0
      %p32 = por %p30, %p31
      %p33 = scmp.ne.s32.totalorder %s22, %s25
      %p34 = scmp.eq.s32.totalorder %s17, 1
      %p35 = por %p33, %p34
      %p36 = scmp.ne.s32.totalorder %s25, %s26
      %p37 = scmp.eq.s32.totalorder %s17, 0
      %p38 = por %p36, %p37
      %p39 = scmp.ne.s32.totalorder %s25, %s26
      %p40 = scmp.eq.s32.totalorder %s18, 1
      %p41 = por %p39, %p40
      %p43 = scmp.ne.s32.totalorder %s26, %s42
      %p44 = scmp.eq.s32.totalorder %s18, 0
      %p45 = por %p43, %p44
      %s47 = sadd.s32 %s46, 1
      %p50 = scmp.eq.s32.totalorder %s12, 1
      %p51 = scmp.ne.s32.totalorder %s46, %s48
      %p52 = scmp.eq.s32.totalorder %s12, 0
      %p53 = por %p51, %p52
      %p54 = scmp.ne.s32.totalorder %s46, %s48
      %p55 = scmp.eq.s32.totalorder %s17, 1
      %p56 = por %p54, %p55
      %p57 = scmp.ne.s32.totalorder %s48, %s49
      %p58 = scmp.eq.s32.totalorder %s17, 0
      %p59 = por %p57, %p58
      %p60 = scmp.ne.s32.totalorder %s48, %s49
      %p61 = scmp.eq.s32.totalorder %s18, 1
      %p62 = por %p60, %p61
      %p64 = scmp.ne.s32.totalorder %s49, %s63
      %p65 = scmp.eq.s32.totalorder %s18, 0
      %p66 = por %p64, %p65
      %s68 = sadd.s32 %s67, 1
      %p71 = scmp.eq.s32.totalorder %s12, 1
      %p72 = scmp.ne.s32.totalorder %s67, %s69
      %p73 = scmp.eq.s32.totalorder %s12, 0
      %p74 = por %p72, %p73
      %p75 = scmp.ne.s32.totalorder %s67, %s69
      %p76 = scmp.eq.s32.totalorder %s17, 1
      %p77 = por %p75, %p76
      %p78 = scmp.ne.s32.totalorder %s69, %s70
      %p79 = scmp.eq.s32.totalorder %s17, 0
      %p80 = por %p78, %p79
      %p81 = scmp.ne.s32.totalorder %s69, %s70
      %p82 = scmp.eq.s32.totalorder %s18, 1
      %p83 = por %p81, %p82
      %p85 = scmp.ne.s32.totalorder %s70, %s84
      %p86 = scmp.eq.s32.totalorder %s18, 0
      %p87 = por %p85, %p86
      %s88 = ssub.s32 %s12, %s19
      %p89 = scmp.eq.s32.totalorder %s88, 0
      %s91 = sadd.s32 %s90, 1
      %s92 = scalar_select %p89, %s90, %s91
      %p95 = pneg %p89
      %p96 = scmp.eq.s32.totalorder %s12, 1
      %p97 = por %p95, %p96
      %p98 = scmp.ne.s32.totalorder %s90, %s93
      %p99 = scmp.eq.s32.totalorder %s12, 0
      %p100 = por %p98, %p99
      %p101 = scmp.ne.s32.totalorder %s90, %s93
      %p102 = scmp.eq.s32.totalorder %s17, 1
      %p103 = por %p101, %p102
      %p104 = scmp.ne.s32.totalorder %s93, %s94
      %p105 = scmp.eq.s32.totalorder %s17, 0
      %p106 = por %p104, %p105
      %p107 = scmp.ne.s32.totalorder %s93, %s94
      %p108 = scmp.eq.s32.totalorder %s18, 1
      %p109 = por %p107, %p108
      %p111 = scmp.ne.s32.totalorder %s94, %s110
      %p112 = scmp.eq.s32.totalorder %s18, 0
      %p113 = por %p111, %p112
      %p114 = scmp.le.s32.totalorder 1, %s12
      %p115 = scmp.lt.s32.totalorder %s12, 3
      %p116 = pnand %p114, %p115
      %p117 = pneg %p116
      // Predicated region
      $region9: #{down_forward.5} parent=5 // pred_check
        _
      $region10: #{down_forward.5} parent=5 // pred_check_branch
        %119 = sbr.rel (%p116) target = $region12
      $region11: #{down_forward.5} parent=5 // pred_region
        %s120 = ssub.s32 %s12, 1
        // Predicated region
        $region13: #{down_forward.5} parent=11 // pred_check
          %p121 = pneg %p59
        $region14: #{down_forward.5} parent=11 // pred_check_branch
          %123 = sbr.rel (%p121) target = $region16
        $region15: #{down_forward.5} parent=11 // pred_region
          _
        $region16: #{down_forward.5} parent=11 // pred_fallthru
          _
        // Predicated region
        $region17: #{down_forward.5} parent=11 // pred_check
          %p124 = pneg %p80
        $region18: #{down_forward.5} parent=11 // pred_check_branch
          %126 = sbr.rel (%p124) target = $region20
        $region19: #{down_forward.5} parent=11 // pred_region
          _
        $region20: #{down_forward.5} parent=11 // pred_fallthru
          _
      $region12: #{down_forward.5} parent=5 // pred_fallthru
        _
      %p127 = scmp.lt.s32.totalorder %s12, 2
      // Predicated region
      $region21: #{down_forward.5} parent=5 // pred_check
        %p128 = pneg %p127
      $region22: #{down_forward.5} parent=5 // pred_check_branch
        %130 = sbr.rel (%p128) target = $region24
      $region23: #{down_forward.5} parent=5 // pred_region
        // Predicated region
        $region25: #{down_forward.5} parent=23 // pred_check
          %p131 = pneg %p32
        $region26: #{down_forward.5} parent=23 // pred_check_branch
          %133 = sbr.rel (%p131) target = $region28
        $region27: #{down_forward.5} parent=23 // pred_region
          %p134 = scmp.lt.s32.totalorder %s12, 1
          %s135 = scalar_select %p134, %s12, 1
          %s136 = smul.addr %s135, 8
          %s137 = scalar_lea.vmem %s0, %s136
        $region28: #{down_forward.5} parent=23 // pred_fallthru
          _
      $region24: #{down_forward.5} parent=5 // pred_fallthru
        _
      %p138 = scmp.le.s32.totalorder 1, %s12
      %p139 = scmp.lt.s32.totalorder %s12, 3
      %p140 = pnand %p138, %p139
      %p141 = pneg %p140
      // Predicated region
      $region29: #{down_forward.5} parent=5 // pred_check
        _
      $region30: #{down_forward.5} parent=5 // pred_check_branch
        %143 = sbr.rel (%p140) target = $region32
      $region31: #{down_forward.5} parent=5 // pred_region
        %s144 = ssub.s32 %s12, 1
        %p145 = scmp.lt.s32.totalorder %s17, 1
        %s146 = scalar_select %p145, %s17, 1
        %s147 = smul.addr %s146, 8
        %s148 = scalar_lea.vmem %s0, %s147
        %p149 = pneg %p38
        %p150 = pneg %p35
        %p151 = pneg %p59
        %p152 = pneg %p56
        %p153 = pneg %p80
        %p154 = pneg %p77
        %p155 = pneg %p106
        %p156 = pneg %p103
        %s157 = sand.u32 %s93, 1
        %s158 = scalar_lea.sflag [#allocation3], %s157
        %s159 = sand.u32 %s93, 1
        %s160 = smul.addr %s159, 8
        %s161 = scalar_lea.vmem [#allocation2], %s160
        %p162 = scmp.lt.s32.totalorder %s17, 1
        %s163 = scalar_select %p162, %s17, 1
        %s164 = smul.addr %s163, 8
        %s165 = scalar_lea.vmem %s0, %s164
        %v166 = vld [vmem:[%s165] sm:$0xff]
        %v167 = vld [vmem:[%s1] sm:$0xff]
        %169 = vset.pattern.permute.xlu0 0
        %170 = vperm.xlu0 %169, %v167
        %v171 = vpop.permute.xlu0 %170
        %v173 = vmul.f32 %v166, %v171
        %v174 = vld [vmem:[%s2] sm:$0xff]
        %176 = vset.pattern.permute.xlu0 0
        %177 = vperm.xlu0 %176, %v174
        %v178 = vpop.permute.xlu0 %177
        %v180 = vadd.f32 %v173, %v178
        %v181 = vmax.f32 %v180, 0.0
        %vm182 = vcmask 64512
        %183 = vst.msk [vmem:[%s161] sm:$0xff] %vm182, %v181
        %s184 = sand.u32 %s93, 1
        %s185 = scalar_lea.sflag [#allocation3], %s184
        %s186 = sand.u32 %s93, 1
        %s187 = smul.addr %s186, 8
        %s188 = scalar_lea.vmem [#allocation2], %s187
        // Predicated region
        $region33: #{down_forward.5} parent=31 // pred_check
          %p189 = pneg %p103
        $region34: #{down_forward.5} parent=31 // pred_check_branch
          %191 = sbr.rel (%p189) target = $region36
        $region35: #{down_forward.5} parent=31 // pred_region
          %193 = vsyncadd %s185, 0
          %s194 = smul.addr %s17, 8
          %s195 = scalar_lea.hbm %s3, %s194
          %s197 = sshll.u32 %s188, 4
          %s198 = int_to_ptr.vmem [resolvable:$true] %s197
          %s199 = sshll.u32 %s195, 4
          %s200 = int_to_ptr.hbm [resolvable:$true] %s199
          %202 = dma.vmem_to_hbm [thread:$0]  %s198, 128, %s200, %s185
        $region36: #{down_forward.5} parent=31 // pred_fallthru
          _
      $region32: #{down_forward.5} parent=5 // pred_fallthru
        _
      %p203 = scmp.le.s32.totalorder 2, %s12
      // Predicated region
      $region37: #{down_forward.5} parent=5 // pred_check
        %p204 = pneg %p203
      $region38: #{down_forward.5} parent=5 // pred_check_branch
        %206 = sbr.rel (%p204) target = $region40
      $region39: #{down_forward.5} parent=5 // pred_region
        %s207 = ssub.s32 %s12, 2
        // Predicated region
        $region41: #{down_forward.5} parent=39 // pred_check
          %p208 = pneg %p109
        $region42: #{down_forward.5} parent=39 // pred_check_branch
          %210 = sbr.rel (%p208) target = $region44
        $region43: #{down_forward.5} parent=39 // pred_region
          %s211 = sand.u32 %s94, 1
          %s212 = scalar_lea.sflag [#allocation3], %s211
          %s213 = sand.u32 %s94, 1
          %s214 = smul.addr %s213, 8
          %s215 = scalar_lea.vmem [#allocation2], %s214
          %217 = dma.done %s212, 128
        $region44: #{down_forward.5} parent=39 // pred_fallthru
          _
      $region40: #{down_forward.5} parent=5 // pred_fallthru
        _
    $region6: #{down_forward.5} parent=1 // loop_footer
      %s16 = sadd.s32 1, %s12
    $region7: #{down_forward.5} parent=1 // loop_footer_branch
      %11 = sbr.rel target = $region3
    $region8: #{down_forward.5} parent=1 // loop_exit
      _
    %218 = vsyncpa [#allocation3], 1
    %s219 = scalar_lea.sflag [#allocation3], 1
    %220 = vsyncpa %s219, 1

// kernel: down_forward.4
$region0: #{down_forward.4}
  #allocation0 [shape = 'u32[]', space=smem, size = 0x4, offset = 0x4, fixed_abs, tag = 'smem constant byte address 0x4 - core index']
  #allocation1 [shape = 'u32[72,128]{1,0:T(1,128)}', space=vmem, size = 0x9000, scoped, tag = 'internal scratch']
  %s0 = inlined_call_operand.vmem [shape: bf16[2,8,8], index: 0, kind: input, shape index: {}]
  %s1 = inlined_call_operand.vmem [shape: f32[8,1], index: 1, kind: input, shape index: {}]
  %s2 = inlined_call_operand.vmem [shape: f32[8,1], index: 2, kind: input, shape index: {}]
  %s3 = inlined_call_operand.vmem [shape: bf16[8,40], index: 3, kind: input, shape index: {}]
  %s4 = inlined_call_operand.vmem [shape: f32[2,8,8], index: 4, kind: output, shape index: {0}]
  %s5 = inlined_call_operand.vmem [shape: f32[2,8,2], index: 5, kind: output, shape index: {1}]
  %6 = xla_tuple %s4, %s5
  %s7 = sld [smem:[#allocation0]]
  $region61: #{down_forward.4} parent=0
    _
  %s9 = ssub.s32 1, %s7
  %s10 = scalar_select 0, %s9, %s7
  loop: start=0, step=1, limit=4
  $region2: #{down_forward.4} parent=0 // loop_pre_header
    _
  $region3: #{down_forward.4} parent=0 // loop_header
    %s12 = sphi 0, %s16
    %p13 = scmp.ge.s32.totalorder %s12, 4
    %s19 = sphi 0, %s31
    %s20 = sphi 0, %s27
    %s21 = sphi 0, %s19
    %s22 = sphi 0, %s20
    %s23 = sphi 0, %s21
    %s24 = sphi 0, %s22
    %s36 = sphi 0, %s38
    %s39 = sphi 0, %s36
    %s40 = sphi 0, %s39
    %s56 = sphi 0, %s40
    %s60 = sphi 0, %s60
    %s62 = sphi 0, %s60
    %s63 = sphi 0, %s62
    %s77 = sphi 0, %s63
    %s81 = sphi 0, %s81
    %s83 = sphi 0, %s81
    %s84 = sphi 0, %s83
    %s98 = sphi 0, %s84
    %s102 = sphi 0, %s102
    %s104 = sphi 0, %s102
    %s105 = sphi 0, %s104
    %s119 = sphi 0, %s105
    %s127 = sphi 0, %s129
    %s130 = sphi 0, %s127
    %s131 = sphi 0, %s130
    %s147 = sphi 0, %s131
    %s153 = sphi 0, %s155
    %s156 = sphi 0, %s153
    %s157 = sphi 0, %s156
    %s173 = sphi 0, %s157
  $region4: #{down_forward.4} parent=0 // loop_header_branch
    %15 = sbr.rel (%p13) target = $region8
  $region5: #{down_forward.4} parent=0 // loop_body
    %s17 = ssub.s32 %s12, 1
    %s18 = ssub.s32 %s12, 2
    %s25 = sadd.s32 1, %s20
    %p26 = scmp.ge.s32.totalorder %s25, 1
    %s27 = scalar_select %p26, 0, %s25
    %s28 = sadd.s32 1, %s19
    %s29 = scalar_select %p26, %s28, %s19
    %p30 = scmp.ge.s32.totalorder %s29, 2
    %s31 = scalar_select %p30, 0, %s29
    %s32 = sadd.s32 %s19, %s20
    %s33 = sadd.s32 %s31, %s27
    %s34 = ssub.s32 %s32, %s33
    %p35 = scmp.eq.s32.totalorder %s34, 0
    %s37 = sadd.s32 %s36, 1
    %s38 = scalar_select %p35, %s36, %s37
    %p41 = pneg %p35
    %p42 = scmp.eq.s32.totalorder %s12, 1
    %p43 = por %p41, %p42
    %p44 = scmp.ne.s32.totalorder %s36, %s39
    %p45 = scmp.eq.s32.totalorder %s12, 0
    %p46 = por %p44, %p45
    %p47 = scmp.ne.s32.totalorder %s36, %s39
    %p48 = scmp.eq.s32.totalorder %s17, 1
    %p49 = por %p47, %p48
    %p50 = scmp.ne.s32.totalorder %s39, %s40
    %p51 = scmp.eq.s32.totalorder %s17, 0
    %p52 = por %p50, %p51
    %p53 = scmp.ne.s32.totalorder %s39, %s40
    %p54 = scmp.eq.s32.totalorder %s18, 1
    %p55 = por %p53, %p54
    %p57 = scmp.ne.s32.totalorder %s40, %s56
    %p58 = scmp.eq.s32.totalorder %s18, 0
    %p59 = por %p57, %p58
    %s61 = sadd.s32 %s60, 1
    %p64 = scmp.eq.s32.totalorder %s12, 1
    %p65 = scmp.ne.s32.totalorder %s60, %s62
    %p66 = scmp.eq.s32.totalorder %s12, 0
    %p67 = por %p65, %p66
    %p68 = scmp.ne.s32.totalorder %s60, %s62
    %p69 = scmp.eq.s32.totalorder %s17, 1
    %p70 = por %p68, %p69
    %p71 = scmp.ne.s32.totalorder %s62, %s63
    %p72 = scmp.eq.s32.totalorder %s17, 0
    %p73 = por %p71, %p72
    %p74 = scmp.ne.s32.totalorder %s62, %s63
    %p75 = scmp.eq.s32.totalorder %s18, 1
    %p76 = por %p74, %p75
    %p78 = scmp.ne.s32.totalorder %s63, %s77
    %p79 = scmp.eq.s32.totalorder %s18, 0
    %p80 = por %p78, %p79
    %s82 = sadd.s32 %s81, 1
    %p85 = scmp.eq.s32.totalorder %s12, 1
    %p86 = scmp.ne.s32.totalorder %s81, %s83
    %p87 = scmp.eq.s32.totalorder %s12, 0
    %p88 = por %p86, %p87
    %p89 = scmp.ne.s32.totalorder %s81, %s83
    %p90 = scmp.eq.s32.totalorder %s17, 1
    %p91 = por %p89, %p90
    %p92 = scmp.ne.s32.totalorder %s83, %s84
    %p93 = scmp.eq.s32.totalorder %s17, 0
    %p94 = por %p92, %p93
    %p95 = scmp.ne.s32.totalorder %s83, %s84
    %p96 = scmp.eq.s32.totalorder %s18, 1
    %p97 = por %p95, %p96
    %p99 = scmp.ne.s32.totalorder %s84, %s98
    %p100 = scmp.eq.s32.totalorder %s18, 0
    %p101 = por %p99, %p100
    %s103 = sadd.s32 %s102, 1
    %p106 = scmp.eq.s32.totalorder %s12, 1
    %p107 = scmp.ne.s32.totalorder %s102, %s104
    %p108 = scmp.eq.s32.totalorder %s12, 0
    %p109 = por %p107, %p108
    %p110 = scmp.ne.s32.totalorder %s102, %s104
    %p111 = scmp.eq.s32.totalorder %s17, 1
    %p112 = por %p110, %p111
    %p113 = scmp.ne.s32.totalorder %s104, %s105
    %p114 = scmp.eq.s32.totalorder %s17, 0
    %p115 = por %p113, %p114
    %p116 = scmp.ne.s32.totalorder %s104, %s105
    %p117 = scmp.eq.s32.totalorder %s18, 1
    %p118 = por %p116, %p117
    %p120 = scmp.ne.s32.totalorder %s105, %s119
    %p121 = scmp.eq.s32.totalorder %s18, 0
    %p122 = por %p120, %p121
    %s123 = sadd.s32 %s19, %s20
    %s124 = sadd.s32 %s31, %s27
    %s125 = ssub.s32 %s123, %s124
    %p126 = scmp.eq.s32.totalorder %s125, 0
    %s128 = sadd.s32 %s127, 1
    %s129 = scalar_select %p126, %s127, %s128
    %p132 = pneg %p126
    %p133 = scmp.eq.s32.totalorder %s12, 1
    %p134 = por %p132, %p133
    %p135 = scmp.ne.s32.totalorder %s127, %s130
    %p136 = scmp.eq.s32.totalorder %s12, 0
    %p137 = por %p135, %p136
    %p138 = scmp.ne.s32.totalorder %s127, %s130
    %p139 = scmp.eq.s32.totalorder %s17, 1
    %p140 = por %p138, %p139
    %p141 = scmp.ne.s32.totalorder %s130, %s131
    %p142 = scmp.eq.s32.totalorder %s17, 0
    %p143 = por %p141, %p142
    %p144 = scmp.ne.s32.totalorder %s130, %s131
    %p145 = scmp.eq.s32.totalorder %s18, 1
    %p146 = por %p144, %p145
    %p148 = scmp.ne.s32.totalorder %s131, %s147
    %p149 = scmp.eq.s32.totalorder %s18, 0
    %p150 = por %p148, %p149
    %s151 = ssub.s32 %s19, %s31
    %p152 = scmp.eq.s32.totalorder %s151, 0
    %s154 = sadd.s32 %s153, 1
    %s155 = scalar_select %p152, %s153, %s154
    %p158 = pneg %p152
    %p159 = scmp.eq.s32.totalorder %s12, 1
    %p160 = por %p158, %p159
    %p161 = scmp.ne.s32.totalorder %s153, %s156
    %p162 = scmp.eq.s32.totalorder %s12, 0
    %p163 = por %p161, %p162
    %p164 = scmp.ne.s32.totalorder %s153, %s156
    %p165 = scmp.eq.s32.totalorder %s17, 1
    %p166 = por %p164, %p165
    %p167 = scmp.ne.s32.totalorder %s156, %s157
    %p168 = scmp.eq.s32.totalorder %s17, 0
    %p169 = por %p167, %p168
    %p170 = scmp.ne.s32.totalorder %s156, %s157
    %p171 = scmp.eq.s32.totalorder %s18, 1
    %p172 = por %p170, %p171
    %p174 = scmp.ne.s32.totalorder %s157, %s173
    %p175 = scmp.eq.s32.totalorder %s18, 0
    %p176 = por %p174, %p175
    %p177 = scmp.le.s32.totalorder 1, %s12
    %p178 = scmp.lt.s32.totalorder %s12, 3
    %p179 = pnand %p177, %p178
    %p180 = pneg %p179
    // Predicated region
    $region9: #{down_forward.4} parent=5 // pred_check
      _
    $region10: #{down_forward.4} parent=5 // pred_check_branch
      %182 = sbr.rel (%p179) target = $region12
    $region11: #{down_forward.4} parent=5 // pred_region
      %s183 = ssub.s32 %s12, 1
      // Predicated region
      $region13: #{down_forward.4} parent=11 // pred_check
        %p184 = pneg %p73
      $region14: #{down_forward.4} parent=11 // pred_check_branch
        %186 = sbr.rel (%p184) target = $region16
      $region15: #{down_forward.4} parent=11 // pred_region
        _
      $region16: #{down_forward.4} parent=11 // pred_fallthru
        _
      // Predicated region
      $region17: #{down_forward.4} parent=11 // pred_check
        %p187 = pneg %p94
      $region18: #{down_forward.4} parent=11 // pred_check_branch
        %189 = sbr.rel (%p187) target = $region20
      $region19: #{down_forward.4} parent=11 // pred_region
        _
      $region20: #{down_forward.4} parent=11 // pred_fallthru
        _
      // Predicated region
      $region21: #{down_forward.4} parent=11 // pred_check
        %p190 = pneg %p115
      $region22: #{down_forward.4} parent=11 // pred_check_branch
        %192 = sbr.rel (%p190) target = $region24
      $region23: #{down_forward.4} parent=11 // pred_region
        _
      $region24: #{down_forward.4} parent=11 // pred_fallthru
        _
    $region12: #{down_forward.4} parent=5 // pred_fallthru
      _
    %p193 = scmp.lt.s32.totalorder %s12, 2
    // Predicated region
    $region25: #{down_forward.4} parent=5 // pred_check
      %p194 = pneg %p193
    $region26: #{down_forward.4} parent=5 // pred_check_branch
      %196 = sbr.rel (%p194) target = $region28
    $region27: #{down_forward.4} parent=5 // pred_region
      // Predicated region
      $region29: #{down_forward.4} parent=27 // pred_check
        %p197 = pneg %p46
      $region30: #{down_forward.4} parent=27 // pred_check_branch
        %199 = sbr.rel (%p197) target = $region32
      $region31: #{down_forward.4} parent=27 // pred_region
        %s200 = sadd.s32 %s19, %s20
        %p201 = scmp.lt.s32.totalorder %s200, 1
        %s202 = scalar_select %p201, %s200, 1
        %s203 = smul.addr %s202, 4
        %s204 = scalar_lea.vmem %s0, %s203
        %s205 = sadd.s32 %s19, %s20
      $region32: #{down_forward.4} parent=27 // pred_fallthru
        _
    $region28: #{down_forward.4} parent=5 // pred_fallthru
      _
    %p206 = scmp.le.s32.totalorder 1, %s12
    %p207 = scmp.lt.s32.totalorder %s12, 3
    %p208 = pnand %p206, %p207
    %p209 = pneg %p208
    // Predicated region
    $region33: #{down_forward.4} parent=5 // pred_check
      _
    $region34: #{down_forward.4} parent=5 // pred_check_branch
      %211 = sbr.rel (%p208) target = $region36
    $region35: #{down_forward.4} parent=5 // pred_region
      %s212 = ssub.s32 %s12, 1
      %s213 = sadd.s32 %s21, %s22
      %p214 = scmp.lt.s32.totalorder %s213, 1
      %s215 = scalar_select %p214, %s213, 1
      %s216 = smul.addr %s215, 4
      %s217 = scalar_lea.vmem %s0, %s216
      %p218 = pneg %p52
      %p219 = pneg %p49
      %p220 = pneg %p73
      %p221 = pneg %p70
      %p222 = pneg %p94
      %p223 = pneg %p91
      %p224 = pneg %p115
      %p225 = pneg %p112
      %p226 = pneg %p143
      %p227 = pneg %p140
      %s228 = sadd.s32 %s21, %s22
      %p229 = scmp.lt.s32.totalorder %s228, 1
      %s230 = scalar_select %p229, %s228, 1
      %s231 = smul.addr %s230, 8
      %s232 = scalar_lea.vmem %s4, %s231
      %p233 = pneg %p169
      %p234 = pneg %p166
      %p235 = scmp.lt.s32.totalorder %s21, 1
      %s236 = scalar_select %p235, %s21, 1
      %s237 = smul.addr %s236, 8
      %s238 = scalar_lea.vmem %s5, %s237
      %s239 = sadd.s32 %s21, %s22
      %p240 = scmp.lt.s32.totalorder %s239, 1
      %s241 = scalar_select %p240, %s239, 1
      %s242 = smul.addr %s241, 4
      %s243 = scalar_lea.vmem %s0, %s242
      %s244 = sadd.s32 %s21, %s22
      %s245 = sadd.s32 %s21, %s22
      %p246 = scmp.lt.s32.totalorder %s245, 1
      %s247 = scalar_select %p246, %s245, 1
      %s248 = smul.addr %s247, 8
      %s249 = scalar_lea.vmem %s4, %s248
      %s250 = sadd.s32 %s21, %s22
      %p251 = scmp.lt.s32.totalorder %s21, 1
      %s252 = scalar_select %p251, %s21, 1
      %s253 = smul.addr %s252, 8
      %s254 = scalar_lea.vmem %s5, %s253
      %p256 = scmp.eq.s32.totalorder %s22, 0
      // Predicated region
      $region37: #{down_forward.4} parent=35 // pred_check
        %p257 = pneg %p256
      $region38: #{down_forward.4} parent=35 // pred_check_branch
        %259 = sbr.rel (%p257) target = $region40
      $region39: #{down_forward.4} parent=35 // pred_region
        %vm260 = vcmask 15360
        %261 = vst.msk [vmem:[%s254] sm:$0xff] %vm260, 0.0
      $region40: #{down_forward.4} parent=35 // pred_fallthru
        _
      %v262 = vld [vmem:[%s1] sm:$0xff]
      %v263 = vld [vmem:[%s2] sm:$0xff]
      %v264 = vld [vmem:[%s243] sm:$0xf]
      %v265 = vunpack.c.l.bf16 %v264
      %267 = vset.pattern.permute.xlu0 0
      %268 = vperm.xlu0 %267, %v262
      %v269 = vpop.permute.xlu0 %268
      %v271 = vmul.f32 %v265, %v269
      %273 = vset.pattern.permute.xlu0 0
      %274 = vperm.xlu0 %273, %v263
      %v275 = vpop.permute.xlu0 %274
      %v277 = vadd.f32 %v271, %v275
      %v278 = vmax.f32 %v277, 0.0
      %v279 = vpack.c.bf16 %v278, %v278
      %v281 = vunpack.c.l.b16 %v279
      %v282 = vpack.c.b16 %v281, %v281
      %283 = vrot.lane.b32.xlu0 %v282, 2
      %v284 = vpop.permute.xlu0 %283
      %vm285 = vcmask 15360
      %v288 = vsel %vm285, 0, %v284
      %vm289 = vcmask 80896
      %v290 = vsel %vm289, %v288, 0
      %v292 = vrot.slane %v290, 4
      %293 = vrot.lane.b32.xlu0 %v292, 127
      %v294 = vpop.permute.xlu0 %293
      %295 = vrot.lane.b32.xlu0 %v290, 126
      %v296 = vpop.permute.xlu0 %295
      %297 = vrot.lane.b32.xlu0 %v292, 125
      %v298 = vpop.permute.xlu0 %297
      %299 = vrot.lane.b32.xlu0 %v290, 124
      %v300 = vpop.permute.xlu0 %299
      %vm301 = vcmask 1043456
      %v303 = vsel %vm301, %v290, %v294
      %v307 = vsel %vm301, %v296, %v298
      %v309 = vld [vmem:[%s3] sm:$0xf]
      %vm310 = vcmask 326656
      %v312 = vsel %vm310, %v309, 0
      %v315 = vsel %vm301, %v300, 0
      %317 = vmatpush.bf16.msra.mxu0 0
      %318 = vmatpush.bf16.msra.mxu0 0
      %319 = vmatpush.bf16.msra.mxu0 0
      %320 = vmatpush.bf16.msra.mxu0 0
      %321 = vmatpush.bf16.msra.mxu0 0
      %322 = vmatpush.bf16.msra.mxu0 %v315
      %323 = vmatpush.bf16.msra.mxu0 %v307
      %324 = vmatpush.bf16.msra.mxu0 %v303
      %325 = vmatmul.bf16.gmra.mxu0 %v312
      %v326 = vpop.f32.mrf.mxu0
      %v327 = vadd.f32 0.0, %v326
      %v328 = vpop.f32.mrf.mxu0
      %329 = vdwg.mxu0
      %vm330 = vcmask 64512
      %331 = vst.msk [vmem:[%s249] sm:$0xff] %vm330, %v327
      %v332 = vsel %vm330, %v327, 0.0
      %333 = vadd.xlane.f32.xlu0 %v332
      %v334 = vpop.xlane.xlu0 %333
      %v335 = vadd.f32 %v334, 0.0
      %v336 = vmul.f32 %v327, %v327
      %v337 = vsel %vm330, %v336, 0.0
      %338 = vadd.xlane.f32.xlu0 %v337
      %v339 = vpop.xlane.xlu0 %338
      %v340 = vadd.f32 %v339, 0.0
      %v341 = vld [vmem:[%s254] sm:$0xff]
      %vm342 = vcmask 7168
      %v343 = vsel %vm342, %v335, %v340
      %v344 = vadd.f32 %v341, %v343
      %345 = vst.msk [vmem:[%s254] sm:$0xff] %vm285, %v344
      %s346 = sadd.s32 %s21, %s22
      %p347 = scmp.lt.s32.totalorder %s346, 1
      %s348 = scalar_select %p347, %s346, 1
      %s349 = smul.addr %s348, 8
      %s350 = scalar_lea.vmem %s4, %s349
      %p351 = scmp.lt.s32.totalorder %s21, 1
      %s352 = scalar_select %p351, %s21, 1
      %s353 = smul.addr %s352, 8
      %s354 = scalar_lea.vmem %s5, %s353
      // Predicated region
      $region41: #{down_forward.4} parent=35 // pred_check
        %p355 = pneg %p140
      $region42: #{down_forward.4} parent=35 // pred_check_branch
        %357 = sbr.rel (%p355) target = $region44
      $region43: #{down_forward.4} parent=35 // pred_region
        %s358 = sadd.s32 %s21, %s22
      $region44: #{down_forward.4} parent=35 // pred_fallthru
        _
      // Predicated region
      $region45: #{down_forward.4} parent=35 // pred_check
        %p359 = pneg %p166
      $region46: #{down_forward.4} parent=35 // pred_check_branch
        %361 = sbr.rel (%p359) target = $region48
      $region47: #{down_forward.4} parent=35 // pred_region
        _
      $region48: #{down_forward.4} parent=35 // pred_fallthru
        _
    $region36: #{down_forward.4} parent=5 // pred_fallthru
      _
    %p362 = scmp.le.s32.totalorder 2, %s12
    // Predicated region
    $region49: #{down_forward.4} parent=5 // pred_check
      %p363 = pneg %p362
    $region50: #{down_forward.4} parent=5 // pred_check_branch
      %365 = sbr.rel (%p363) target = $region52
    $region51: #{down_forward.4} parent=5 // pred_region
      %s366 = ssub.s32 %s12, 2
      // Predicated region
      $region53: #{down_forward.4} parent=51 // pred_check
        %p367 = pneg %p146
      $region54: #{down_forward.4} parent=51 // pred_check_branch
        %369 = sbr.rel (%p367) target = $region56
      $region55: #{down_forward.4} parent=51 // pred_region
        %s370 = sadd.s32 %s23, %s24
        %p371 = scmp.lt.s32.totalorder %s370, 1
        %s372 = scalar_select %p371, %s370, 1
        %s373 = smul.addr %s372, 8
        %s374 = scalar_lea.vmem %s4, %s373
      $region56: #{down_forward.4} parent=51 // pred_fallthru
        _
      // Predicated region
      $region57: #{down_forward.4} parent=51 // pred_check
        %p375 = pneg %p172
      $region58: #{down_forward.4} parent=51 // pred_check_branch
        %377 = sbr.rel (%p375) target = $region60
      $region59: #{down_forward.4} parent=51 // pred_region
        %p378 = scmp.lt.s32.totalorder %s23, 1
        %s379 = scalar_select %p378, %s23, 1
        %s380 = smul.addr %s379, 8
        %s381 = scalar_lea.vmem %s5, %s380
      $region60: #{down_forward.4} parent=51 // pred_fallthru
        _
    $region52: #{down_forward.4} parent=5 // pred_fallthru
      _
  $region6: #{down_forward.4} parent=0 // loop_footer
    %s16 = sadd.s32 1, %s12
  $region7: #{down_forward.4} parent=0 // loop_footer_branch
    %11 = sbr.rel target = $region3
  $region8: #{down_forward.4} parent=0 // loop_exit
    _

</llo_original>
